<compile_context>
chip_gen: v7x
topology: tpu7x:2x2x1
jax: 0.10.0
libtpu: 0.0.40
codegen_flags: <defaults>
</compile_context>

<pallas_src>
import functools
import math

import jax
import jax.numpy as jnp
from jax.experimental import pallas as pl
from jax.experimental.pallas import tpu as pltpu


def _pos_add_kernel(x_ref, pos_ref, o_ref):
    # x_ref: (TB, R) batch-row block; pos_ref: (1, R) resident positions row.
    # Pure VPU vadd with an in-register sublane broadcast; the kernel is
    # HBM-streaming-bound, so no compute slot is anywhere near saturating.
    o_ref[...] = x_ref[...] + pos_ref[...]


_MIN_BYTES_FOR_KERNEL = 1 * 1024 * 1024   # below this, a fused XLA add wins
_CORE_PARALLEL_BROKEN = False             # flipped if CORE_PARALLEL fails to lower here


def _device_kind() -> str:
    try:
        return jax.devices()[0].device_kind.lower()
    except Exception:
        return ""


@functools.lru_cache(maxsize=None)
def _chip_params():
    """Returns (target block bytes, use CORE_PARALLEL) per TPU generation."""
    kind = _device_kind()
    if "v7" in kind:
        # ~3.2 TB/s HBM: 8 MiB blocks push per-step overhead to ~5%;
        # 2 TCs/chip -> shard the batch grid axis across both cores.
        return 8 * 1024 * 1024, True
    if "v6" in kind:
        # measured f32-add roofline plateaus ~85-86% at 1-4 MiB blocks.
        return 4 * 1024 * 1024, False
    # v5e / unknown: 2 MiB already keeps step overhead <7% at ~0.8 TB/s and
    # stays well inside the 16 MiB default scoped VMEM.
    return 2 * 1024 * 1024, False


@functools.lru_cache(maxsize=None)
def _build_pos_add(x_shape, dtype_name, donate, core_parallel):
    dtype = jnp.dtype(dtype_name)
    itemsize = dtype.itemsize
    N, D = x_shape[-2:]
    lead = x_shape[:-2]
    B = math.prod(lead) if lead else 1
    R = N * D                                 # lane-dense row; full last dim is always legal

    block_bytes, _ = _chip_params()
    row_bytes = max(R * itemsize, 1)
    sub = max(8, 32 // itemsize)              # sublane packing: f32->8, bf16->16, int8/fp8->32
    tb = max(1, block_bytes // row_bytes)
    if tb >= B:
        tb = B                                # block == full array dim (always legal)
    else:
        tb = max(sub, (tb // sub) * sub)
    grid0 = pl.cdiv(B, tb)

    # Footprint-derived VMEM limit: 2x double-buffered in/out blocks + the tiny
    # positions row + slack; never request all of v7x's 64 MiB physical VMEM.
    footprint = 2 * 2 * tb * R * itemsize + 2 * R * itemsize
    vmem_limit = int(min(48 * 1024 * 1024,
                         max(footprint + 4 * 1024 * 1024, 16 * 1024 * 1024)))

    if core_parallel and grid0 > 1:
        sems = (pltpu.CORE_PARALLEL,)         # actually splits the grid across v7x's 2 TCs
    else:
        sems = (pltpu.PARALLEL,)

    call = pl.pallas_call(
        _pos_add_kernel,
        out_shape=jax.ShapeDtypeStruct((B, R), dtype),
        grid_spec=pltpu.PrefetchScalarGridSpec(
            num_scalar_prefetch=0,
            grid=(grid0,),
            in_specs=[
                pl.BlockSpec((tb, R), lambda i: (i, 0)),
                pl.BlockSpec((1, R), lambda i: (0, 0)),   # constant block index -> DMA'd once
            ],
            out_specs=pl.BlockSpec((tb, R), lambda i: (i, 0)),
        ),
        compiler_params=pltpu.CompilerParams(
            dimension_semantics=sems,
            vmem_limit_bytes=vmem_limit,
        ),
        # Only alias when the caller really donates x; aliasing without
        # donation makes XLA insert a defensive copy (full extra HBM r+w).
        input_output_aliases={0: 0} if donate else {},
    )

    def run(x, positions):
        x2 = x.reshape(B, R)                              # contiguous -> bitcast under jit
        pos2 = positions.astype(dtype).reshape(1, R)
        return call(x2, pos2).reshape(x_shape)

    return jax.jit(run, donate_argnums=(0,) if donate else ())


def position_encoder(x, positions, *, force_pallas=False, donate=False):
    """x: (..., N, D), positions: (N, D) -> x + positions (PyTorch `x += positions`).

    donate=True gives x's buffer to the kernel (true in-place semantics);
    the caller must not reuse x afterwards.
    """
    global _CORE_PARALLEL_BROKEN
    N, D = positions.shape
    assert x.shape[-2:] == (N, D), (x.shape, positions.shape)

    total_bytes = x.size * x.dtype.itemsize
    if not force_pallas and total_bytes < _MIN_BYTES_FOR_KERNEL:
        # Tiny tensors: pallas launch overhead dwarfs moving a few KiB; XLA
        # fuses this broadcast-add into neighbors for free.
        return x + positions.astype(x.dtype)

    _, core_parallel = _chip_params()
    use_cp = core_parallel and not _CORE_PARALLEL_BROKEN
    dtype_name = x.dtype.name
    try:
        fn = _build_pos_add(tuple(x.shape), dtype_name, bool(donate), use_cp)
        return fn(x, positions)
    except Exception:
        if not use_cp:
            raise
        # CORE_PARALLEL unsupported by this toolchain/chip: fall back once.
        _CORE_PARALLEL_BROKEN = True
        fn = _build_pos_add(tuple(x.shape), dtype_name, bool(donate), False)
        return fn(x, positions)


if __name__ == "__main__":
    # Module config: feature_dim=32, feature_num=7 -> positions (8, 32)
    feature_dim = 32
    feature_num = 7
    N, D = feature_num + 1, feature_dim

    key = jax.random.PRNGKey(0)
    kx, kp, kx2, kx3 = jax.random.split(key, 4)

    positions = jax.random.uniform(kp, (N, D), dtype=jnp.float32)

    # 1) Small shape consistent with the module (batch=2), forced through the kernel.
    x_small = jax.random.normal(kx, (2, N, D), dtype=jnp.float32)
    ref_small = x_small + positions[None, :, :]
    out_small = jax.block_until_ready(
        position_encoder(x_small, positions, force_pallas=True))
    assert out_small.shape == x_small.shape
    assert jnp.allclose(out_small, ref_small, atol=1e-6), "small-shape mismatch vs reference"

    # 2) Multiple leading batch dims, odd flattened row count (full-extent single block).
    x_multi = jax.random.normal(kx3, (3, 5, N, D), dtype=jnp.float32)
    ref_multi = x_multi + positions
    out_multi = jax.block_until_ready(
        position_encoder(x_multi, positions, force_pallas=True))
    assert out_multi.shape == x_multi.shape
    assert jnp.allclose(out_multi, ref_multi, atol=1e-6), "multi-lead mismatch vs reference"

    # 3) Larger batch exercises the tiled multi-block path (grid > 1, per-gen block size).
    B_big = 12288
    x_big = jax.random.normal(kx2, (B_big, N, D), dtype=jnp.float32)
    ref_big = x_big + positions[None, :, :]
    out_big = jax.block_until_ready(position_encoder(x_big, positions))
    assert out_big.shape == x_big.shape
    assert jnp.allclose(out_big, ref_big, atol=1e-6), "large-shape mismatch vs reference"

    # 4) Donated (true in-place) path: x_donated is given away and not reused.
    x_donated = x_big + 0.0                       # fresh buffer to donate
    out_don = jax.block_until_ready(
        position_encoder(x_donated, positions, donate=True))
    del x_donated
    assert jnp.allclose(out_don, ref_big, atol=1e-6), "donated-path mismatch vs reference"

    # 5) Tiny-tensor dispatch path (plain XLA add) sanity check.
    out_tiny = jax.block_until_ready(position_encoder(x_small, positions))
    assert jnp.allclose(out_tiny, ref_small, atol=1e-6), "tiny-path mismatch vs reference"

    print("KERNEL_OK")
</pallas_src>

<mosaic_0001>
module attributes {stable_mosaic.version = 11 : i64} {
  func.func @_pos_add_kernel(%arg0: i32, %arg1: memref<2x256xf32, #tpu.memory_space<vmem>>, %arg2: memref<1x256xf32, #tpu.memory_space<vmem>>, %arg3: memref<2x256xf32, #tpu.memory_space<vmem>>) attributes {dimension_semantics = [#tpu.dimension_semantics<parallel>], iteration_bounds = array<i64: 1>, scalar_prefetch = 0 : i64, scratch_operands = 0 : i64, tpu.core_type = #tpu.core_type<tc>, window_params = [{transform_indices = @transform_0, window_bounds = array<i64: 2, 256>}, {pipeline_mode = #tpu.pipeline_mode<synchronous>, transform_indices = @transform_1, window_bounds = array<i64: 1, 256>}, {transform_indices = @transform_2, window_bounds = array<i64: 2, 256>}]} {
    %c0 = arith.constant 0 : index
    %c0_0 = arith.constant 0 : index
    %0 = vector.load %arg1[%c0, %c0_0] : memref<2x256xf32, #tpu.memory_space<vmem>>, vector<2x256xf32>
    %c0_1 = arith.constant 0 : index
    %c0_2 = arith.constant 0 : index
    %1 = vector.load %arg2[%c0_1, %c0_2] : memref<1x256xf32, #tpu.memory_space<vmem>>, vector<1x256xf32>
    %2 = vector.broadcast %1 : vector<1x256xf32> to vector<2x256xf32>
    %3 = arith.addf %0, %2 : vector<2x256xf32>
    %c0_3 = arith.constant 0 : index
    %c0_4 = arith.constant 0 : index
    %4 = vector.load %arg3[%c0_3, %c0_4] : memref<2x256xf32, #tpu.memory_space<vmem>>, vector<2x256xf32>
    tpu.vector_store %arg3[%c0_3, %c0_4], %3 {strides = array<i32>} : memref<2x256xf32, #tpu.memory_space<vmem>>, vector<2x256xf32>,
    return
  }
  func.func @transform_0(%arg0: i32) -> (i32, i32) {
    %c0_i32 = arith.constant 0 : i32
    %c0_i32_0 = arith.constant 0 : i32
    return %arg0, %c0_i32 : i32, i32
  }
  func.func @transform_1(%arg0: i32) -> (i32, i32) {
    %c0_i32 = arith.constant 0 : i32
    %c0_i32_0 = arith.constant 0 : i32
    %c0_i32_1 = arith.constant 0 : i32
    return %c0_i32, %c0_i32_0 : i32, i32
  }
  func.func @transform_2(%arg0: i32) -> (i32, i32) {
    %c0_i32 = arith.constant 0 : i32
    %c0_i32_0 = arith.constant 0 : i32
    return %arg0, %c0_i32 : i32, i32
  }
}

</mosaic_0001>

<llo_original>
// kernel: run.1
$region0: #{run.1}
  #allocation0 [shape = 'u32[]', space=smem, size = 0x4, offset = 0x4, fixed_abs, tag = 'smem constant byte address 0x4 - core index']
  #allocation1 [shape = 'u32[144,128]{1,0:T(1,128)}', space=vmem, size = 0x12000, scoped, tag = 'internal scratch']
  %s0 = inlined_call_operand.vmem [shape: f32[2,256], index: 0, kind: input, shape index: {}]
  %s1 = inlined_call_operand.vmem [shape: f32[1,256], index: 1, kind: input, shape index: {}]
  %s2 = inlined_call_operand.vmem [shape: f32[2,256], index: 2, kind: output, shape index: {}]
  %s3 = sld [smem:[#allocation0]]
  $region18: #{run.1} parent=0
    _
  %s5 = ssub.s32 1, %s3
  %s6 = scalar_select 0, %s5, %s3
  // Predicated region
  $region2: #{run.1} parent=0 // pred_check
    _
  $region3: #{run.1} parent=0 // pred_check_branch
    %8 = sbr.rel (0) target = $region5
  $region4: #{run.1} parent=0 // pred_region
    _
  $region5: #{run.1} parent=0 // pred_fallthru
    _
  // Predicated region
  $region6: #{run.1} parent=0 // pred_check
    _
  $region7: #{run.1} parent=0 // pred_check_branch
    %10 = sbr.rel (0) target = $region9
  $region8: #{run.1} parent=0 // pred_region
    _
  $region9: #{run.1} parent=0 // pred_fallthru
    _
  %v11 = vld [vmem:[%s0] sm:$0xf]
  %v12 = vld [vmem:[%s1] sm:$0x3]
  %v14 = vlaneseq
  %v15 = vshrl.u32 %v14, 7
  %v16 = vsub.s32 0, %v15
  %v17 = vrot.slane %v12, %v16
  %v18 = vlaneseq
  %v19 = vshrl.u32 %v18, 7
  %v20 = vsub.s32 1, %v19
  %v21 = vrot.slane %v12, %v20
  %v22 = vcombine.low %v17, %v21
  %v24 = vunpack.c.l.s4 1983009808
  %v25 = vunpack.c.0.s8 %v24
  %v26 = vlaneseq
  %v27 = vshrl.u32 %v26, 7
  %v28 = vsub.s32 %v25, %v27
  %v29 = vrot.slane %v22, %v28
  %v31 = vadd.f32 %v11, %v29
  %32 = vst [vmem:[%s2] sm:$0xf] %v31
  // Predicated region
  $region10: #{run.1} parent=0 // pred_check
    _
  $region11: #{run.1} parent=0 // pred_check_branch
    %34 = sbr.rel (0) target = $region13
  $region12: #{run.1} parent=0 // pred_region
    _
  $region13: #{run.1} parent=0 // pred_fallthru
    _
  // Predicated region
  $region14: #{run.1} parent=0 // pred_check
    _
  $region15: #{run.1} parent=0 // pred_check_branch
    %36 = sbr.rel (0) target = $region17
  $region16: #{run.1} parent=0 // pred_region
    _
  $region17: #{run.1} parent=0 // pred_fallthru
    _

</llo_original>
